<compile_context>
chip_gen: v7x
topology: tpu7x:2x2x1
jax: 0.10.0
libtpu: 0.0.40
codegen_flags: <defaults>
</compile_context>

<pallas_src>
import jax
import jax.numpy as jnp
from jax.experimental import pallas as pl
from jax.experimental.pallas import tpu as pltpu

LANE = 128          # padded hidden width (lanes)
SUBLANE = 8         # batch padding granularity
BATCH_BLOCK = 512   # rows per grid step (multiple of 8)
NEG_SLOPE = 0.01    # torch.nn.LeakyReLU default


def _leaky_relu(x):
    return jnp.where(x > 0, x, NEG_SLOPE * x)


def distnet_kernel(x_ref, w1_ref, b1_ref, w2_ref, b2_ref,
                   w3_ref, b3_ref, w4t_ref, b4_ref, o_ref):
    """One batch block of the whole MLP. Weights are VMEM-resident."""
    x = x_ref[...]            # (BM, 3) f32
    w1 = w1_ref[...]          # (8, 128); rows >= 3 are zero

    # Layer 1 (3 -> 10, padded to 128 lanes) via VPU broadcasts: avoids a
    # K=3 matmul and lets the input stay 3 columns wide in HBM.
    h = (x[:, 0:1] * w1[0:1, :]
         + x[:, 1:2] * w1[1:2, :]
         + x[:, 2:3] * w1[2:3, :]
         + b1_ref[...])                                   # (BM, 128)
    h = _leaky_relu(h)

    # Layers 2 & 3 (10 -> 10, padded) on the MXU.
    h = jnp.dot(h, w2_ref[...], preferred_element_type=jnp.float32) + b2_ref[...]
    h = _leaky_relu(h)

    h = jnp.dot(h, w3_ref[...], preferred_element_type=jnp.float32) + b3_ref[...]
    h = _leaky_relu(h)

    # Layer 4 (10 -> 1) as a lane reduction: z = sum_f h[:, f] * w4[f, 0] + b4.
    z = jnp.sum(h * w4t_ref[...], axis=1, keepdims=True) + b4_ref[...]   # (BM, 1)

    # Sigmoid (exact, f32).
    o_ref[...] = 1.0 / (1.0 + jnp.exp(-z))


def _pad2d(a, rows, cols):
    r, c = a.shape
    return jnp.pad(a, ((0, rows - r), (0, cols - c)))


def prepare_params(params):
    """Pad weights/biases to TPU-friendly shapes ONCE (outside the hot path)."""
    (w1, b1), (w2, b2), (w3, b3), (w4, b4) = params
    w1_p = _pad2d(w1.astype(jnp.float32), SUBLANE, LANE)            # (8, 128)
    b1_p = _pad2d(b1.reshape(1, -1).astype(jnp.float32), 1, LANE)   # (1, 128)
    w2_p = _pad2d(w2.astype(jnp.float32), LANE, LANE)               # (128, 128)
    b2_p = _pad2d(b2.reshape(1, -1).astype(jnp.float32), 1, LANE)
    w3_p = _pad2d(w3.astype(jnp.float32), LANE, LANE)
    b3_p = _pad2d(b3.reshape(1, -1).astype(jnp.float32), 1, LANE)
    w4t_p = _pad2d(w4.T.astype(jnp.float32), 1, LANE)               # (1, 128)
    b4_p = b4.reshape(1, 1).astype(jnp.float32)                     # (1, 1)
    return (w1_p, b1_p, w2_p, b2_p, w3_p, b3_p, w4t_p, b4_p)


@jax.jit
def distnet_forward(x, padded_params):
    """x: [..., 3] (or flat [3]); returns [batch, 1] like the PyTorch module."""
    x = jnp.reshape(x, (-1, 3)).astype(jnp.float32)
    b = x.shape[0]

    b8 = ((b + SUBLANE - 1) // SUBLANE) * SUBLANE
    bm = min(BATCH_BLOCK, b8)                      # rows per grid step
    b_pad = ((b + bm - 1) // bm) * bm              # multiple of bm (and of 8)
    n_blocks = b_pad // bm

    # Only pad batch rows (3 columns wide) -- no 128-lane HBM inflation.
    x_p = jnp.pad(x, ((0, b_pad - b), (0, 0)))

    resident = lambda shape: pl.BlockSpec(shape, lambda i: (0, 0))
    in_specs = [
        pl.BlockSpec((bm, 3), lambda i: (i, 0)),   # streamed input block
        resident((SUBLANE, LANE)),                 # w1  (8, 128)
        resident((1, LANE)),                       # b1
        resident((LANE, LANE)),                    # w2
        resident((1, LANE)),                       # b2
        resident((LANE, LANE)),                    # w3
        resident((1, LANE)),                       # b3
        resident((1, LANE)),                       # w4^T
        resident((1, 1)),                          # b4
    ]
    out_specs = pl.BlockSpec((bm, 1), lambda i: (i, 0))

    out = pl.pallas_call(
        distnet_kernel,
        out_shape=jax.ShapeDtypeStruct((b_pad, 1), jnp.float32),
        grid=(n_blocks,),
        in_specs=in_specs,
        out_specs=out_specs,
        compiler_params=pltpu.CompilerParams(
            dimension_semantics=("parallel",)),
    )(x_p, *padded_params)

    return out[:b]


def init_params(key):
    """Deterministic params matching nn.Linear default init (U(-k, k), k=1/sqrt(fan_in))."""
    sizes = [(3, 10), (10, 10), (10, 10), (10, 1)]
    params = []
    for (fan_in, fan_out) in sizes:
        key, kw, kb = jax.random.split(key, 3)
        bound = 1.0 / jnp.sqrt(fan_in)
        w = jax.random.uniform(kw, (fan_in, fan_out), jnp.float32, -bound, bound)
        bias = jax.random.uniform(kb, (fan_out,), jnp.float32, -bound, bound)
        params.append((w, bias))
    return params


def reference_forward(x, params):
    """Pure-JAX reference for the correctness check."""
    h = jnp.reshape(x, (-1, 3)).astype(jnp.float32)
    for i, (w, bias) in enumerate(params):
        h = h @ w + bias
        if i < len(params) - 1:
            h = _leaky_relu(h)
    return jax.nn.sigmoid(h)


if __name__ == "__main__":
    key = jax.random.PRNGKey(0)
    params = init_params(key)
    padded_params = prepare_params(params)

    # Small example, as in the module spec: [batch, 3].
    x = jax.random.normal(jax.random.PRNGKey(1), (2, 3), jnp.float32)
    out = jax.block_until_ready(distnet_forward(x, padded_params))
    ref = reference_forward(x, params)
    assert out.shape == (2, 1), out.shape
    assert jnp.allclose(out, ref, atol=1e-5, rtol=1e-5), (out, ref)

    # A second (still small) batch that exercises the multi-block grid path.
    x2 = jax.random.normal(jax.random.PRNGKey(2), (520, 3), jnp.float32)
    out2 = jax.block_until_ready(distnet_forward(x2, padded_params))
    ref2 = reference_forward(x2, params)
    assert out2.shape == (520, 1), out2.shape
    assert jnp.allclose(out2, ref2, atol=1e-5, rtol=1e-5)

    print("KERNEL_OK")
</pallas_src>

<mosaic_0001>
module attributes {stable_mosaic.version = 11 : i64} {
  func.func @distnet_kernel(%arg0: i32, %arg1: memref<8x3xf32, #tpu.memory_space<vmem>>, %arg2: memref<8x128xf32, #tpu.memory_space<vmem>>, %arg3: memref<1x128xf32, #tpu.memory_space<vmem>>, %arg4: memref<128x128xf32, #tpu.memory_space<vmem>>, %arg5: memref<1x128xf32, #tpu.memory_space<vmem>>, %arg6: memref<128x128xf32, #tpu.memory_space<vmem>>, %arg7: memref<1x128xf32, #tpu.memory_space<vmem>>, %arg8: memref<1x128xf32, #tpu.memory_space<vmem>>, %arg9: memref<1x1xf32, #tpu.memory_space<vmem>>, %arg10: memref<8x1xf32, #tpu.memory_space<vmem>>) attributes {dimension_semantics = [#tpu.dimension_semantics<parallel>], iteration_bounds = array<i64: 1>, scalar_prefetch = 0 : i64, scratch_operands = 0 : i64, tpu.core_type = #tpu.core_type<tc>, window_params = [{transform_indices = @transform_0, window_bounds = array<i64: 8, 3>}, {pipeline_mode = #tpu.pipeline_mode<synchronous>, transform_indices = @transform_1, window_bounds = array<i64: 8, 128>}, {pipeline_mode = #tpu.pipeline_mode<synchronous>, transform_indices = @transform_2, window_bounds = array<i64: 1, 128>}, {pipeline_mode = #tpu.pipeline_mode<synchronous>, transform_indices = @transform_3, window_bounds = array<i64: 128, 128>}, {pipeline_mode = #tpu.pipeline_mode<synchronous>, transform_indices = @transform_4, window_bounds = array<i64: 1, 128>}, {pipeline_mode = #tpu.pipeline_mode<synchronous>, transform_indices = @transform_5, window_bounds = array<i64: 128, 128>}, {pipeline_mode = #tpu.pipeline_mode<synchronous>, transform_indices = @transform_6, window_bounds = array<i64: 1, 128>}, {pipeline_mode = #tpu.pipeline_mode<synchronous>, transform_indices = @transform_7, window_bounds = array<i64: 1, 128>}, {pipeline_mode = #tpu.pipeline_mode<synchronous>, transform_indices = @transform_8, window_bounds = array<i64: 1, 1>}, {transform_indices = @transform_9, window_bounds = array<i64: 8, 1>}]} {
    %c0 = arith.constant 0 : index
    %c0_0 = arith.constant 0 : index
    %0 = vector.load %arg1[%c0, %c0_0] : memref<8x3xf32, #tpu.memory_space<vmem>>, vector<8x3xf32>
    %c0_1 = arith.constant 0 : index
    %c0_2 = arith.constant 0 : index
    %1 = vector.load %arg2[%c0_1, %c0_2] : memref<8x128xf32, #tpu.memory_space<vmem>>, vector<8x128xf32>
    %2 = vector.extract_strided_slice %0 {offsets = [0, 0], sizes = [8, 1], strides = [1, 1]} : vector<8x3xf32> to vector<8x1xf32>
    %3 = vector.extract_strided_slice %1 {offsets = [0, 0], sizes = [1, 128], strides = [1, 1]} : vector<8x128xf32> to vector<1x128xf32>
    %4 = vector.broadcast %2 : vector<8x1xf32> to vector<8x128xf32>
    %5 = vector.broadcast %3 : vector<1x128xf32> to vector<8x128xf32>
    %6 = arith.mulf %4, %5 : vector<8x128xf32>
    %7 = vector.extract_strided_slice %0 {offsets = [0, 1], sizes = [8, 1], strides = [1, 1]} : vector<8x3xf32> to vector<8x1xf32>
    %8 = vector.extract_strided_slice %1 {offsets = [1, 0], sizes = [1, 128], strides = [1, 1]} : vector<8x128xf32> to vector<1x128xf32>
    %9 = vector.broadcast %7 : vector<8x1xf32> to vector<8x128xf32>
    %10 = vector.broadcast %8 : vector<1x128xf32> to vector<8x128xf32>
    %11 = arith.mulf %9, %10 : vector<8x128xf32>
    %12 = arith.addf %6, %11 : vector<8x128xf32>
    %13 = vector.extract_strided_slice %0 {offsets = [0, 2], sizes = [8, 1], strides = [1, 1]} : vector<8x3xf32> to vector<8x1xf32>
    %14 = vector.extract_strided_slice %1 {offsets = [2, 0], sizes = [1, 128], strides = [1, 1]} : vector<8x128xf32> to vector<1x128xf32>
    %15 = vector.broadcast %13 : vector<8x1xf32> to vector<8x128xf32>
    %16 = vector.broadcast %14 : vector<1x128xf32> to vector<8x128xf32>
    %17 = arith.mulf %15, %16 : vector<8x128xf32>
    %18 = arith.addf %12, %17 : vector<8x128xf32>
    %c0_3 = arith.constant 0 : index
    %c0_4 = arith.constant 0 : index
    %19 = vector.load %arg3[%c0_3, %c0_4] : memref<1x128xf32, #tpu.memory_space<vmem>>, vector<1x128xf32>
    %20 = vector.broadcast %19 : vector<1x128xf32> to vector<8x128xf32>
    %21 = arith.addf %18, %20 : vector<8x128xf32>
    %cst = arith.constant 0.000000e+00 : f32
    %22 = vector.broadcast %cst : f32 to vector<8x128xf32>
    %23 = arith.cmpf ogt, %21, %22 : vector<8x128xf32>
    %cst_5 = arith.constant 0.00999999977 : f32
    %24 = vector.broadcast %cst_5 : f32 to vector<8x128xf32>
    %25 = arith.mulf %24, %21 : vector<8x128xf32>
    %26 = arith.select %23, %21, %25 : vector<8x128xi1>, vector<8x128xf32>
    %c0_6 = arith.constant 0 : index
    %c0_7 = arith.constant 0 : index
    %27 = vector.load %arg4[%c0_6, %c0_7] : memref<128x128xf32, #tpu.memory_space<vmem>>, vector<128x128xf32>
    %cst_8 = arith.constant dense<0.000000e+00> : vector<8x128xf32>
    %28 = tpu.matmul %26, %27, %cst_8 {dimension_numbers = #tpu.dot_dimension_numbers<[1], [0], [0], [1], [0, 0, 1, 1], [], []>} : vector<8x128xf32>, vector<128x128xf32>, vector<8x128xf32> -> vector<8x128xf32>
    %c0_9 = arith.constant 0 : index
    %c0_10 = arith.constant 0 : index
    %29 = vector.load %arg5[%c0_9, %c0_10] : memref<1x128xf32, #tpu.memory_space<vmem>>, vector<1x128xf32>
    %30 = vector.broadcast %29 : vector<1x128xf32> to vector<8x128xf32>
    %31 = arith.addf %28, %30 : vector<8x128xf32>
    %cst_11 = arith.constant 0.000000e+00 : f32
    %32 = vector.broadcast %cst_11 : f32 to vector<8x128xf32>
    %33 = arith.cmpf ogt, %31, %32 : vector<8x128xf32>
    %cst_12 = arith.constant 0.00999999977 : f32
    %34 = vector.broadcast %cst_12 : f32 to vector<8x128xf32>
    %35 = arith.mulf %34, %31 : vector<8x128xf32>
    %36 = arith.select %33, %31, %35 : vector<8x128xi1>, vector<8x128xf32>
    %c0_13 = arith.constant 0 : index
    %c0_14 = arith.constant 0 : index
    %37 = vector.load %arg6[%c0_13, %c0_14] : memref<128x128xf32, #tpu.memory_space<vmem>>, vector<128x128xf32>
    %cst_15 = arith.constant dense<0.000000e+00> : vector<8x128xf32>
    %38 = tpu.matmul %36, %37, %cst_15 {dimension_numbers = #tpu.dot_dimension_numbers<[1], [0], [0], [1], [0, 0, 1, 1], [], []>} : vector<8x128xf32>, vector<128x128xf32>, vector<8x128xf32> -> vector<8x128xf32>
    %c0_16 = arith.constant 0 : index
    %c0_17 = arith.constant 0 : index
    %39 = vector.load %arg7[%c0_16, %c0_17] : memref<1x128xf32, #tpu.memory_space<vmem>>, vector<1x128xf32>
    %40 = vector.broadcast %39 : vector<1x128xf32> to vector<8x128xf32>
    %41 = arith.addf %38, %40 : vector<8x128xf32>
    %cst_18 = arith.constant 0.000000e+00 : f32
    %42 = vector.broadcast %cst_18 : f32 to vector<8x128xf32>
    %43 = arith.cmpf ogt, %41, %42 : vector<8x128xf32>
    %cst_19 = arith.constant 0.00999999977 : f32
    %44 = vector.broadcast %cst_19 : f32 to vector<8x128xf32>
    %45 = arith.mulf %44, %41 : vector<8x128xf32>
    %46 = arith.select %43, %41, %45 : vector<8x128xi1>, vector<8x128xf32>
    %c0_20 = arith.constant 0 : index
    %c0_21 = arith.constant 0 : index
    %47 = vector.load %arg8[%c0_20, %c0_21] : memref<1x128xf32, #tpu.memory_space<vmem>>, vector<1x128xf32>
    %48 = vector.broadcast %47 : vector<1x128xf32> to vector<8x128xf32>
    %49 = arith.mulf %46, %48 : vector<8x128xf32>
    %cst_22 = arith.constant dense<0.000000e+00> : vector<8xf32>
    %50 = vector.multi_reduction <add>, %49, %cst_22 [1] : vector<8x128xf32> to vector<8xf32>
    %51 = vector.shape_cast %50 : vector<8xf32> to vector<8x1xf32>
    %c0_23 = arith.constant 0 : index
    %c0_24 = arith.constant 0 : index
    %52 = vector.load %arg9[%c0_23, %c0_24] : memref<1x1xf32, #tpu.memory_space<vmem>>, vector<1x1xf32>
    %53 = vector.broadcast %52 : vector<1x1xf32> to vector<8x1xf32>
    %54 = arith.addf %51, %53 : vector<8x1xf32>
    %cst_25 = arith.constant 0.000000e+00 : f32
    %55 = vector.broadcast %cst_25 : f32 to vector<8x1xf32>
    %56 = arith.subf %55, %54 : vector<8x1xf32>
    %57 = math.exp %56 : vector<8x1xf32>
    %cst_26 = arith.constant 1.000000e+00 : f32
    %58 = vector.broadcast %cst_26 : f32 to vector<8x1xf32>
    %59 = arith.addf %58, %57 : vector<8x1xf32>
    %cst_27 = arith.constant 1.000000e+00 : f32
    %60 = vector.broadcast %cst_27 : f32 to vector<8x1xf32>
    %61 = arith.divf %60, %59 : vector<8x1xf32>
    %c0_28 = arith.constant 0 : index
    %c0_29 = arith.constant 0 : index
    %62 = vector.load %arg10[%c0_28, %c0_29] : memref<8x1xf32, #tpu.memory_space<vmem>>, vector<8x1xf32>
    tpu.vector_store %arg10[%c0_28, %c0_29], %61 {strides = array<i32>} : memref<8x1xf32, #tpu.memory_space<vmem>>, vector<8x1xf32>,
    return
  }
  func.func @transform_0(%arg0: i32) -> (i32, i32) {
    %c0_i32 = arith.constant 0 : i32
    %c0_i32_0 = arith.constant 0 : i32
    return %arg0, %c0_i32 : i32, i32
  }
  func.func @transform_1(%arg0: i32) -> (i32, i32) {
    %c0_i32 = arith.constant 0 : i32
    %c0_i32_0 = arith.constant 0 : i32
    %c0_i32_1 = arith.constant 0 : i32
    return %c0_i32, %c0_i32_0 : i32, i32
  }
  func.func @transform_2(%arg0: i32) -> (i32, i32) {
    %c0_i32 = arith.constant 0 : i32
    %c0_i32_0 = arith.constant 0 : i32
    %c0_i32_1 = arith.constant 0 : i32
    return %c0_i32, %c0_i32_0 : i32, i32
  }
  func.func @transform_3(%arg0: i32) -> (i32, i32) {
    %c0_i32 = arith.constant 0 : i32
    %c0_i32_0 = arith.constant 0 : i32
    %c0_i32_1 = arith.constant 0 : i32
    return %c0_i32, %c0_i32_0 : i32, i32
  }
  func.func @transform_4(%arg0: i32) -> (i32, i32) {
    %c0_i32 = arith.constant 0 : i32
    %c0_i32_0 = arith.constant 0 : i32
    %c0_i32_1 = arith.constant 0 : i32
    return %c0_i32, %c0_i32_0 : i32, i32
  }
  func.func @transform_5(%arg0: i32) -> (i32, i32) {
    %c0_i32 = arith.constant 0 : i32
    %c0_i32_0 = arith.constant 0 : i32
    %c0_i32_1 = arith.constant 0 : i32
    return %c0_i32, %c0_i32_0 : i32, i32
  }
  func.func @transform_6(%arg0: i32) -> (i32, i32) {
    %c0_i32 = arith.constant 0 : i32
    %c0_i32_0 = arith.constant 0 : i32
    %c0_i32_1 = arith.constant 0 : i32
    return %c0_i32, %c0_i32_0 : i32, i32
  }
  func.func @transform_7(%arg0: i32) -> (i32, i32) {
    %c0_i32 = arith.constant 0 : i32
    %c0_i32_0 = arith.constant 0 : i32
    %c0_i32_1 = arith.constant 0 : i32
    return %c0_i32, %c0_i32_0 : i32, i32
  }
  func.func @transform_8(%arg0: i32) -> (i32, i32) {
    %c0_i32 = arith.constant 0 : i32
    %c0_i32_0 = arith.constant 0 : i32
    %c0_i32_1 = arith.constant 0 : i32
    return %c0_i32, %c0_i32_0 : i32, i32
  }
  func.func @transform_9(%arg0: i32) -> (i32, i32) {
    %c0_i32 = arith.constant 0 : i32
    %c0_i32_0 = arith.constant 0 : i32
    return %arg0, %c0_i32 : i32, i32
  }
}

</mosaic_0001>

<llo_original>
// kernel: distnet_forward.1
$region0: #{distnet_forward.1}
  #allocation0 [shape = 'u32[]', space=smem, size = 0x4, offset = 0x4, fixed_abs, tag = 'smem constant byte address 0x4 - core index']
  #allocation1 [shape = 'u32[144,128]{1,0:T(1,128)}', space=vmem, size = 0x12000, scoped, tag = 'internal scratch']
  #allocation2 [shape = 'f32[1,1]{1,0:T(1,128)S(1)}', space=vmem, size = 0x200, scoped, tag = 'scoped memory for distnet_forward.1']
  %s0 = inlined_call_operand.vmem [shape: f32[8,3], index: 0, kind: input, shape index: {}]
  %s1 = inlined_call_operand.vmem [shape: f32[8,128], index: 1, kind: input, shape index: {}]
  %s2 = inlined_call_operand.vmem [shape: f32[1,128], index: 2, kind: input, shape index: {}]
  %s3 = inlined_call_operand.hbm [shape: f32[128,128], index: 3, kind: input, shape index: {}]
  %s4 = inlined_call_operand.vmem [shape: f32[1,128], index: 4, kind: input, shape index: {}]
  %s5 = inlined_call_operand.hbm [shape: f32[128,128], index: 5, kind: input, shape index: {}]
  %s6 = inlined_call_operand.vmem [shape: f32[1,128], index: 6, kind: input, shape index: {}]
  %s7 = inlined_call_operand.vmem [shape: f32[1,128], index: 7, kind: input, shape index: {}]
  %s8 = inlined_call_operand.<no memory space> [shape: f32[1,1], index: 8, kind: input, shape index: {}]
  %s9 = inlined_call_operand.vmem [shape: f32[8,1], index: 9, kind: output, shape index: {}]
  %s10 = sld [smem:[#allocation0]]
  $region54: #{distnet_forward.1} parent=0
    _
  %s12 = ssub.s32 1, %s10
  %s13 = scalar_select 0, %s12, %s10
  %v14 = vstv %s8
  %15 = vst [vmem:[#allocation2] sm:$0x1] %v14
  $region1: #{distnet_forward.1} parent=0
    #allocation3 [shape = 'u8[65536]{0}', space=vmem, size = 0x10000, scoped, tag = 'input window, operand 3, single buffered']
    #allocation4 [shape = 's32[1]{0}', space=sflag, size = 0x4, scoped, tag = 'scoped memory for distnet_forward.1']
    #allocation5 [shape = 'u8[65536]{0}', space=vmem, size = 0x10000, scoped, tag = 'input window, operand 5, single buffered']
    #allocation6 [shape = 's32[1]{0}', space=sflag, size = 0x4, scoped, tag = 'scoped memory for distnet_forward.1']
    %16 = vsyncpa [#allocation4], 0
    %17 = vsyncpa [#allocation6], 0
    // Predicated region
    $region2: #{distnet_forward.1} parent=1 // pred_check
      _
    $region3: #{distnet_forward.1} parent=1 // pred_check_branch
      %19 = sbr.rel (0) target = $region5
    $region4: #{distnet_forward.1} parent=1 // pred_region
      _
    $region5: #{distnet_forward.1} parent=1 // pred_fallthru
      _
    // Predicated region
    $region6: #{distnet_forward.1} parent=1 // pred_check
      _
    $region7: #{distnet_forward.1} parent=1 // pred_check_branch
      %21 = sbr.rel (0) target = $region9
    $region8: #{distnet_forward.1} parent=1 // pred_region
      _
    $region9: #{distnet_forward.1} parent=1 // pred_fallthru
      _
    // Predicated region
    $region10: #{distnet_forward.1} parent=1 // pred_check
      _
    $region11: #{distnet_forward.1} parent=1 // pred_check_branch
      %23 = sbr.rel (0) target = $region13
    $region12: #{distnet_forward.1} parent=1 // pred_region
      _
    $region13: #{distnet_forward.1} parent=1 // pred_fallthru
      _
    // Predicated region
    $region14: #{distnet_forward.1} parent=1 // pred_check
      _
    $region15: #{distnet_forward.1} parent=1 // pred_check_branch
      %25 = sbr.rel (0) target = $region17
    $region16: #{distnet_forward.1} parent=1 // pred_region
      %s27 = ssub.s32 2048, 2048
      %28 = vsyncadd [#allocation4], %s27
      %s29 = sshll.u32 [#allocation3], 4
      %s30 = int_to_ptr.vmem [resolvable:$true] %s29
      %35 = dma.hbm_to_vmem [thread:$0]  %s3, 2048, %s30, [#allocation4], 128, 128, 8
    $region17: #{distnet_forward.1} parent=1 // pred_fallthru
      _
    // Predicated region
    $region18: #{distnet_forward.1} parent=1 // pred_check
      _
    $region19: #{distnet_forward.1} parent=1 // pred_check_branch
      %37 = sbr.rel (0) target = $region21
    $region20: #{distnet_forward.1} parent=1 // pred_region
      _
    $region21: #{distnet_forward.1} parent=1 // pred_fallthru
      _
    // Predicated region
    $region22: #{distnet_forward.1} parent=1 // pred_check
      _
    $region23: #{distnet_forward.1} parent=1 // pred_check_branch
      %39 = sbr.rel (0) target = $region25
    $region24: #{distnet_forward.1} parent=1 // pred_region
      %s41 = ssub.s32 2048, 2048
      %42 = vsyncadd [#allocation6], %s41
      %s43 = sshll.u32 [#allocation5], 4
      %s44 = int_to_ptr.vmem [resolvable:$true] %s43
      %49 = dma.hbm_to_vmem [thread:$0]  %s5, 2048, %s44, [#allocation6], 128, 128, 8
    $region25: #{distnet_forward.1} parent=1 // pred_fallthru
      _
    // Predicated region
    $region26: #{distnet_forward.1} parent=1 // pred_check
      _
    $region27: #{distnet_forward.1} parent=1 // pred_check_branch
      %51 = sbr.rel (0) target = $region29
    $region28: #{distnet_forward.1} parent=1 // pred_region
      _
    $region29: #{distnet_forward.1} parent=1 // pred_fallthru
      _
    // Predicated region
    $region30: #{distnet_forward.1} parent=1 // pred_check
      _
    $region31: #{distnet_forward.1} parent=1 // pred_check_branch
      %53 = sbr.rel (0) target = $region33
    $region32: #{distnet_forward.1} parent=1 // pred_region
      _
    $region33: #{distnet_forward.1} parent=1 // pred_fallthru
      _
    // Predicated region
    $region34: #{distnet_forward.1} parent=1 // pred_check
      _
    $region35: #{distnet_forward.1} parent=1 // pred_check_branch
      %55 = sbr.rel (0) target = $region37
    $region36: #{distnet_forward.1} parent=1 // pred_region
      _
    $region37: #{distnet_forward.1} parent=1 // pred_fallthru
      _
    // Predicated region
    $region38: #{distnet_forward.1} parent=1 // pred_check
      _
    $region39: #{distnet_forward.1} parent=1 // pred_check_branch
      %57 = sbr.rel (0) target = $region41
    $region40: #{distnet_forward.1} parent=1 // pred_region
      %58 = dma.done [#allocation4], 2048
    $region41: #{distnet_forward.1} parent=1 // pred_fallthru
      _
    // Predicated region
    $region42: #{distnet_forward.1} parent=1 // pred_check
      _
    $region43: #{distnet_forward.1} parent=1 // pred_check_branch
      %60 = sbr.rel (0) target = $region45
    $region44: #{distnet_forward.1} parent=1 // pred_region
      %61 = dma.done [#allocation6], 2048
    $region45: #{distnet_forward.1} parent=1 // pred_fallthru
      _
    %v62 = vld [vmem:[%s0] sm:$0xff]
    %v63 = vld [vmem:[%s1] sm:$0xff]
    %65 = vset.pattern.permute.xlu0 0
    %66 = vperm.xlu0 %65, %v62
    %v67 = vpop.permute.xlu0 %66
    %v69 = vlaneseq
    %v70 = vshrl.u32 %v69, 7
    %v71 = vsub.s32 0, %v70
    %v72 = vrot.slane %v63, %v71
    %v73 = vmul.f32 %v67, %v72
    %74 = vset.pattern.permute.xlu0 1
    %75 = vperm.xlu0 %74, %v62
    %v76 = vpop.permute.xlu0 %75
    %v78 = vlaneseq
    %v79 = vshrl.u32 %v78, 7
    %v80 = vsub.s32 1, %v79
    %v81 = vrot.slane %v63, %v80
    %v82 = vmul.f32 %v76, %v81
    %v83 = vadd.f32 %v73, %v82
    %84 = vset.pattern.permute.xlu0 2
    %85 = vperm.xlu0 %84, %v62
    %v86 = vpop.permute.xlu0 %85
    %v88 = vlaneseq
    %v89 = vshrl.u32 %v88, 7
    %v90 = vsub.s32 2, %v89
    %v91 = vrot.slane %v63, %v90
    %v92 = vmul.f32 %v86, %v91
    %v93 = vadd.f32 %v83, %v92
    %v94 = vld [vmem:[%s2] sm:$0x1]
    %v96 = vlaneseq
    %v97 = vshrl.u32 %v96, 7
    %v98 = vsub.s32 0, %v97
    %v99 = vrot.slane %v94, %v98
    %v101 = vadd.f32 %v93, %v99
    %vm102 = vcmp.gt.f32.partialorder %v101, 0.0
    %v103 = vmul.f32 %v101, 0.01
    %v104 = vsel %vm102, %v101, %v103
    %v105 = vld [vmem:[#allocation3] sm:$0xff]
    %v106 = vld [vmem:[#allocation3 + $0x8] sm:$0xff]
    %v107 = vld [vmem:[#allocation3 + $0x10] sm:$0xff]
    %v108 = vld [vmem:[#allocation3 + $0x18] sm:$0xff]
    %v109 = vld [vmem:[#allocation3 + $0x20] sm:$0xff]
    %v110 = vld [vmem:[#allocation3 + $0x28] sm:$0xff]
    %v111 = vld [vmem:[#allocation3 + $0x30] sm:$0xff]
    %v112 = vld [vmem:[#allocation3 + $0x38] sm:$0xff]
    %v113 = vld [vmem:[#allocation3 + $0x40] sm:$0xff]
    %v114 = vld [vmem:[#allocation3 + $0x48] sm:$0xff]
    %v115 = vld [vmem:[#allocation3 + $0x50] sm:$0xff]
    %v116 = vld [vmem:[#allocation3 + $0x58] sm:$0xff]
    %v117 = vld [vmem:[#allocation3 + $0x60] sm:$0xff]
    %v118 = vld [vmem:[#allocation3 + $0x68] sm:$0xff]
    %v119 = vld [vmem:[#allocation3 + $0x70] sm:$0xff]
    %v120 = vld [vmem:[#allocation3 + $0x78] sm:$0xff]
    %v121 = vld [vmem:[%s4] sm:$0x1]
    %v123 = vlaneseq
    %v124 = vshrl.u32 %v123, 7
    %v125 = vsub.s32 0, %v124
    %v126 = vrot.slane %v121, %v125
    %128 = vmatprep.subr.mxu0 0.0
    %129 = vmatpush1.msra.mxu0 %v105
    %130 = vmatprep.subr.mxu0 0.0
    %131 = vmatpush1.msra.mxu0 %v106
    %132 = vmatprep.subr.mxu0 0.0
    %133 = vmatpush1.msra.mxu0 %v107
    %134 = vmatprep.subr.mxu0 0.0
    %135 = vmatpush1.msra.mxu0 %v108
    %136 = vmatprep.subr.mxu0 0.0
    %137 = vmatpush1.msra.mxu0 %v109
    %138 = vmatprep.subr.mxu0 0.0
    %139 = vmatpush1.msra.mxu0 %v110
    %140 = vmatprep.subr.mxu0 0.0
    %141 = vmatpush1.msra.mxu0 %v111
    %142 = vmatprep.subr.mxu0 0.0
    %143 = vmatpush1.msra.mxu0 %v112
    %144 = vmatprep.subr.mxu0 0.0
    %145 = vmatpush1.msra.mxu0 %v113
    %146 = vmatprep.subr.mxu0 0.0
    %147 = vmatpush1.msra.mxu0 %v114
    %148 = vmatprep.subr.mxu0 0.0
    %149 = vmatpush1.msra.mxu0 %v115
    %150 = vmatprep.subr.mxu0 0.0
    %151 = vmatpush1.msra.mxu0 %v116
    %152 = vmatprep.subr.mxu0 0.0
    %153 = vmatpush1.msra.mxu0 %v117
    %154 = vmatprep.subr.mxu0 0.0
    %155 = vmatpush1.msra.mxu0 %v118
    %156 = vmatprep.subr.mxu0 0.0
    %157 = vmatpush1.msra.mxu0 %v119
    %158 = vmatprep.subr.mxu0 0.0
    %159 = vmatpush1.msra.mxu0 %v120
    %160 = vmatprep.subr.mxu0 0.0
    %161 = vmatpush1.msra.mxu0 0.0
    %162 = vmatprep.subr.mxu0 0.0
    %163 = vmatpush1.msra.mxu0 0.0
    %164 = vmatprep.subr.mxu0 0.0
    %165 = vmatpush1.msra.mxu0 0.0
    %166 = vmatprep.subr.mxu0 0.0
    %167 = vmatpush1.msra.mxu0 0.0
    %168 = vmatprep.subr.mxu0 0.0
    %169 = vmatpush1.msra.mxu0 0.0
    %170 = vmatprep.subr.mxu0 0.0
    %171 = vmatpush1.msra.mxu0 0.0
    %172 = vmatprep.subr.mxu0 0.0
    %173 = vmatpush1.msra.mxu0 0.0
    %174 = vmatprep.subr.mxu0 0.0
    %175 = vmatpush1.msra.mxu0 0.0
    %176 = vmatprep.subr.mxu0 0.0
    %177 = vmatpush1.msra.mxu0 0.0
    %178 = vmatprep.subr.mxu0 0.0
    %179 = vmatpush1.msra.mxu0 0.0
    %180 = vmatprep.subr.mxu0 0.0
    %181 = vmatpush1.msra.mxu0 0.0
    %182 = vmatprep.subr.mxu0 0.0
    %183 = vmatpush1.msra.mxu0 0.0
    %184 = vmatprep.subr.mxu0 0.0
    %185 = vmatpush1.msra.mxu0 0.0
    %186 = vmatprep.subr.mxu0 0.0
    %187 = vmatpush1.msra.mxu0 0.0
    %188 = vmatprep.subr.mxu0 0.0
    %189 = vmatpush1.msra.mxu0 0.0
    %190 = vmatprep.subr.mxu0 0.0
    %191 = vmatpush1.msra.mxu0 0.0
    %192 = vmatprep.mubr.f32.mxu0 0.0
    %193 = vmatmul.mubr.f32.gmra.mrb[0].mxu0 %v104
    %v194 = vpop.f32.mrb[0].mxu0
    %v195 = vadd.f32 %v126, %v194
    %v196 = vpop.f32.mrb[0].mxu0
    %197 = vdwg.mxu0
    %vm198 = vcmp.gt.f32.partialorder %v195, 0.0
    %v199 = vmul.f32 %v195, 0.01
    %v200 = vsel %vm198, %v195, %v199
    %v201 = vld [vmem:[#allocation5] sm:$0xff]
    %v202 = vld [vmem:[#allocation5 + $0x8] sm:$0xff]
    %v203 = vld [vmem:[#allocation5 + $0x10] sm:$0xff]
    %v204 = vld [vmem:[#allocation5 + $0x18] sm:$0xff]
    %v205 = vld [vmem:[#allocation5 + $0x20] sm:$0xff]
    %v206 = vld [vmem:[#allocation5 + $0x28] sm:$0xff]
    %v207 = vld [vmem:[#allocation5 + $0x30] sm:$0xff]
    %v208 = vld [vmem:[#allocation5 + $0x38] sm:$0xff]
    %v209 = vld [vmem:[#allocation5 + $0x40] sm:$0xff]
    %v210 = vld [vmem:[#allocation5 + $0x48] sm:$0xff]
    %v211 = vld [vmem:[#allocation5 + $0x50] sm:$0xff]
    %v212 = vld [vmem:[#allocation5 + $0x58] sm:$0xff]
    %v213 = vld [vmem:[#allocation5 + $0x60] sm:$0xff]
    %v214 = vld [vmem:[#allocation5 + $0x68] sm:$0xff]
    %v215 = vld [vmem:[#allocation5 + $0x70] sm:$0xff]
    %v216 = vld [vmem:[#allocation5 + $0x78] sm:$0xff]
    %v217 = vld [vmem:[%s6] sm:$0x1]
    %v219 = vlaneseq
    %v220 = vshrl.u32 %v219, 7
    %v221 = vsub.s32 0, %v220
    %v222 = vrot.slane %v217, %v221
    %224 = vmatprep.subr.mxu0 0.0
    %225 = vmatpush1.msra.mxu0 %v201
    %226 = vmatprep.subr.mxu0 0.0
    %227 = vmatpush1.msra.mxu0 %v202
    %228 = vmatprep.subr.mxu0 0.0
    %229 = vmatpush1.msra.mxu0 %v203
    %230 = vmatprep.subr.mxu0 0.0
    %231 = vmatpush1.msra.mxu0 %v204
    %232 = vmatprep.subr.mxu0 0.0
    %233 = vmatpush1.msra.mxu0 %v205
    %234 = vmatprep.subr.mxu0 0.0
    %235 = vmatpush1.msra.mxu0 %v206
    %236 = vmatprep.subr.mxu0 0.0
    %237 = vmatpush1.msra.mxu0 %v207
    %238 = vmatprep.subr.mxu0 0.0
    %239 = vmatpush1.msra.mxu0 %v208
    %240 = vmatprep.subr.mxu0 0.0
    %241 = vmatpush1.msra.mxu0 %v209
    %242 = vmatprep.subr.mxu0 0.0
    %243 = vmatpush1.msra.mxu0 %v210
    %244 = vmatprep.subr.mxu0 0.0
    %245 = vmatpush1.msra.mxu0 %v211
    %246 = vmatprep.subr.mxu0 0.0
    %247 = vmatpush1.msra.mxu0 %v212
    %248 = vmatprep.subr.mxu0 0.0
    %249 = vmatpush1.msra.mxu0 %v213
    %250 = vmatprep.subr.mxu0 0.0
    %251 = vmatpush1.msra.mxu0 %v214
    %252 = vmatprep.subr.mxu0 0.0
    %253 = vmatpush1.msra.mxu0 %v215
    %254 = vmatprep.subr.mxu0 0.0
    %255 = vmatpush1.msra.mxu0 %v216
    %256 = vmatprep.subr.mxu0 0.0
    %257 = vmatpush1.msra.mxu0 0.0
    %258 = vmatprep.subr.mxu0 0.0
    %259 = vmatpush1.msra.mxu0 0.0
    %260 = vmatprep.subr.mxu0 0.0
    %261 = vmatpush1.msra.mxu0 0.0
    %262 = vmatprep.subr.mxu0 0.0
    %263 = vmatpush1.msra.mxu0 0.0
    %264 = vmatprep.subr.mxu0 0.0
    %265 = vmatpush1.msra.mxu0 0.0
    %266 = vmatprep.subr.mxu0 0.0
    %267 = vmatpush1.msra.mxu0 0.0
    %268 = vmatprep.subr.mxu0 0.0
    %269 = vmatpush1.msra.mxu0 0.0
    %270 = vmatprep.subr.mxu0 0.0
    %271 = vmatpush1.msra.mxu0 0.0
    %272 = vmatprep.subr.mxu0 0.0
    %273 = vmatpush1.msra.mxu0 0.0
    %274 = vmatprep.subr.mxu0 0.0
    %275 = vmatpush1.msra.mxu0 0.0
    %276 = vmatprep.subr.mxu0 0.0
    %277 = vmatpush1.msra.mxu0 0.0
    %278 = vmatprep.subr.mxu0 0.0
    %279 = vmatpush1.msra.mxu0 0.0
    %280 = vmatprep.subr.mxu0 0.0
    %281 = vmatpush1.msra.mxu0 0.0
    %282 = vmatprep.subr.mxu0 0.0
    %283 = vmatpush1.msra.mxu0 0.0
    %284 = vmatprep.subr.mxu0 0.0
    %285 = vmatpush1.msra.mxu0 0.0
    %286 = vmatprep.subr.mxu0 0.0
    %287 = vmatpush1.msra.mxu0 0.0
    %288 = vmatprep.mubr.f32.mxu0 0.0
    %289 = vmatmul.mubr.f32.gmra.mrb[0].mxu0 %v200
    %v290 = vpop.f32.mrb[0].mxu0
    %v291 = vadd.f32 %v222, %v290
    %v292 = vpop.f32.mrb[0].mxu0
    %293 = vdwg.mxu0
    %vm294 = vcmp.gt.f32.partialorder %v291, 0.0
    %v295 = vmul.f32 %v291, 0.01
    %v296 = vsel %vm294, %v291, %v295
    %v297 = vld [vmem:[%s7] sm:$0x1]
    %v299 = vlaneseq
    %v300 = vshrl.u32 %v299, 7
    %v301 = vsub.s32 0, %v300
    %v302 = vrot.slane %v297, %v301
    %v304 = vmul.f32 %v296, %v302
    %305 = vadd.xlane.f32.xlu0 %v304
    %v306 = vpop.xlane.xlu0 %305
    %v307 = vld [vmem:[#allocation2] sm:$0x1]
    %v309 = vlaneseq
    %v310 = vshrl.u32 %v309, 7
    %v311 = vsub.s32 0, %v310
    %v312 = vrot.slane %v307, %v311
    %v314 = vadd.f32 %v306, %v312
    %v315 = vsub.f32 0.0, %v314
    %v316 = vmul.f32 %v315, 1.442695
    %v317 = vpow.pop %v316
    %v318 = vadd.f32 %v317, 1.0
    %v319 = vrcp.pop %v318
    %v320 = vmul.f32 1.0, %v319
    %vm321 = vcmask 7168
    %322 = vst.msk [vmem:[%s9] sm:$0xff] %vm321, %v320
    // Predicated region
    $region46: #{distnet_forward.1} parent=1 // pred_check
      _
    $region47: #{distnet_forward.1} parent=1 // pred_check_branch
      %324 = sbr.rel (0) target = $region49
    $region48: #{distnet_forward.1} parent=1 // pred_region
      _
    $region49: #{distnet_forward.1} parent=1 // pred_fallthru
      _
    // Predicated region
    $region50: #{distnet_forward.1} parent=1 // pred_check
      _
    $region51: #{distnet_forward.1} parent=1 // pred_check_branch
      %326 = sbr.rel (0) target = $region53
    $region52: #{distnet_forward.1} parent=1 // pred_region
      _
    $region53: #{distnet_forward.1} parent=1 // pred_fallthru
      _
    %327 = vsyncpa [#allocation4], 1
    %328 = vsyncpa [#allocation6], 1

</llo_original>
